<compile_context>
chip_gen: v5e
topology: v5e:2x2
jax: 0.10.0
libtpu: 0.0.40
codegen_flags: <defaults>
</compile_context>

<pallas_src>
import math

import jax
import jax.numpy as jnp
from jax.experimental import pallas as pl
from jax.experimental.pallas import tpu as pltpu


def _round_up(x: int, m: int) -> int:
    return ((x + m - 1) // m) * m


def _pad_dim(d: int) -> int:
    # Lane-dense padding.  128 keeps v5e (4x128x128 MXU) tiles full; when the
    # true dim already exceeds 128, round to 256 so v6e/v7x (2x256x256 MXU)
    # systolic passes are fully filled.  No extra waste when d <= 128.
    return _round_up(d, 128) if d <= 128 else _round_up(d, 256)


def _choose_batch_tiling(B: int, *, max_tb: int = 2048, mult: int = 16):
    """Return (tile_rows, num_tiles).

    tile_rows is a multiple of 16 (bf16 packs sublanes in pairs), the tile
    count is even (>=2) when there is enough work so v7x can shard the batch
    grid across both TensorCores and the pipeline has steps to overlap, and
    tile_rows is derived from B (not a fixed 512) to bound padding waste.
    """
    if B <= 2 * mult:
        return _round_up(B, mult), 1
    n = max(2, 2 * math.ceil(math.ceil(B / max_tb) / 2))   # even tile count
    tb = _round_up(math.ceil(B / n), mult)
    return tb, n


def _vmem_capacity_bytes(default: int = 64 << 20) -> int:
    """Per-core VMEM capacity; conservative (v7x) default if the query fails."""
    try:
        return int(pltpu.get_tpu_info().vmem_capacity_bytes)
    except Exception:
        return default


def _gain_generator_kernel(x_ref, m_ref, w1x_ref, w1m_ref, b1_ref,
                           w2_ref, b2_ref, w3_ref, b3_ref, o_ref):
    """One batch tile of the 3-layer GAIN generator MLP.

    x_ref, m_ref : (TB, Dp) bf16  -- features_combined / missing_mask tiles
    w*_ref       : bf16 weights, VMEM-resident (single-buffered) across grid
    b*_ref       : (1, .) f32 biases
    o_ref        : (TB, Dp) bf16
    """
    f32 = jnp.float32
    bf16 = jnp.bfloat16

    # Layer 1: x@W1x + m@W1m (equivalent to cat([x, m]) @ W1, without the
    # HBM concat round trip).  f32 accumulation, f32 epilogue.
    h1 = jnp.dot(x_ref[...], w1x_ref[...], preferred_element_type=f32)
    h1 = h1 + jnp.dot(m_ref[...], w1m_ref[...], preferred_element_type=f32)
    h1 = jnp.maximum(h1 + b1_ref[...], 0.0)

    # Layer 2.
    h2 = jnp.dot(h1.astype(bf16), w2_ref[...], preferred_element_type=f32)
    h2 = jnp.maximum(h2 + b2_ref[...], 0.0)

    # Layer 3 + sigmoid (exp on EUP).  Store bf16 to halve writeback traffic.
    logits = jnp.dot(h2.astype(bf16), w3_ref[...], preferred_element_type=f32)
    logits = logits + b3_ref[...]
    o_ref[...] = jax.nn.sigmoid(logits).astype(o_ref.dtype)


def gain_generator_forward(features_combined, missing_mask, params, *,
                           tb=None, out_dtype=jnp.float32):
    """Launch the Pallas kernel with a batch-tiled, lane-dense layout."""
    B, D = features_combined.shape
    H = params["w1x"].shape[1]

    Dp, Hp = _pad_dim(D), _pad_dim(H)

    if tb is None:
        tb, n_tiles = _choose_batch_tiling(B)
    else:
        tb = _round_up(tb, 16)
        n_tiles = math.ceil(B / tb)
    Bp = tb * n_tiles

    f32, bf16 = jnp.float32, jnp.bfloat16

    # ---- wrapper-side prep: one fused pad+cast per array, no concat --------
    # TODO(synk): with CompilerParams(allow_input_fusion=...) even these small
    # pad+cast passes could fold into the pallas_call prologue.
    x = jnp.pad(features_combined.astype(bf16), ((0, Bp - B), (0, Dp - D)))
    m = jnp.pad(missing_mask.astype(bf16), ((0, Bp - B), (0, Dp - D)))

    w1x = jnp.pad(params["w1x"], ((0, Dp - D), (0, Hp - H))).astype(bf16)
    w1m = jnp.pad(params["w1m"], ((0, Dp - D), (0, Hp - H))).astype(bf16)
    b1 = jnp.pad(params["b1"], ((0, 0), (0, Hp - H))).astype(f32)
    w2 = jnp.pad(params["w2"], ((0, Hp - H), (0, Hp - H))).astype(bf16)
    b2 = jnp.pad(params["b2"], ((0, 0), (0, Hp - H))).astype(f32)
    w3 = jnp.pad(params["w3"], ((0, Hp - H), (0, Dp - D))).astype(bf16)
    b3 = jnp.pad(params["b3"], ((0, 0), (0, Dp - D))).astype(f32)

    # ---- VMEM budget: double-buffered activations, single-buffered weights --
    act_in = 2 * 2 * (tb * Dp * 2)                 # x & m tiles, bf16, 2-deep
    act_out = 2 * (tb * Dp * 2)                    # bf16 out, 2-deep
    w_bytes = (2 * Dp * Hp + Hp * Hp + Hp * Dp) * 2
    b_bytes = (2 * Hp + Dp) * 4
    inter = 2 * tb * Hp * 4                        # live f32 h1/h2 values
    est = act_in + act_out + w_bytes + b_bytes + inter
    # Generation-aware cap: ~48 MiB usable on v7x (64 MiB/core), ~100 MiB on
    # v5e/v6e (128 MiB).  Never request more than the chip physically has.
    cap = min(_vmem_capacity_bytes() - (16 << 20), 100 << 20)
    vmem_limit = int(min(max(2 * est + (4 << 20), 32 << 20), cap))

    # ---- cost hint for XLA's scheduler around the call ----------------------
    flops = 2 * Bp * (2 * Dp * Hp + Hp * Hp + Hp * Dp)
    cost = pl.CostEstimate(
        flops=flops,
        transcendentals=Bp * Dp,                                 # sigmoid exp
        bytes_accessed=2 * Bp * Dp * 2 + w_bytes + b_bytes + Bp * Dp * 2,
    )

    def _build(single_buffer_weights: bool):
        # Grid-invariant operands: constant index_map; single-buffer them so
        # the pipeliner does not allocate two copies of each weight.
        wmode = ({"pipeline_mode": pl.Buffered(1)}
                 if single_buffer_weights else {})
        in_specs = [
            pl.BlockSpec((tb, Dp), lambda i: (i, 0)),             # x tile
            pl.BlockSpec((tb, Dp), lambda i: (i, 0)),             # m tile
            pl.BlockSpec((Dp, Hp), lambda i: (0, 0), **wmode),    # W1x
            pl.BlockSpec((Dp, Hp), lambda i: (0, 0), **wmode),    # W1m
            pl.BlockSpec((1, Hp),  lambda i: (0, 0), **wmode),    # b1
            pl.BlockSpec((Hp, Hp), lambda i: (0, 0), **wmode),    # W2
            pl.BlockSpec((1, Hp),  lambda i: (0, 0), **wmode),    # b2
            pl.BlockSpec((Hp, Dp), lambda i: (0, 0), **wmode),    # W3
            pl.BlockSpec((1, Dp),  lambda i: (0, 0), **wmode),    # b3
        ]
        out_specs = pl.BlockSpec((tb, Dp), lambda i: (i, 0))
        return pl.pallas_call(
            _gain_generator_kernel,
            out_shape=jax.ShapeDtypeStruct((Bp, Dp), bf16),
            grid_spec=pltpu.PrefetchScalarGridSpec(
                num_scalar_prefetch=0,
                grid=(n_tiles,),
                in_specs=in_specs,
                out_specs=out_specs,
            ),
            compiler_params=pltpu.CompilerParams(
                dimension_semantics=("parallel",),
                vmem_limit_bytes=vmem_limit,
            ),
            cost_estimate=cost,
        )

    args = (x, m, w1x, w1m, b1, w2, b2, w3, b3)
    try:
        out_padded = _build(True)(*args)
    except Exception:
        # Defensive fallback: if this JAX build rejects pl.Buffered(1)
        # single-buffering, use default double-buffered weights (identical
        # semantics, slightly more VMEM).
        out_padded = _build(False)(*args)

    out = out_padded[:B, :D]
    return out.astype(out_dtype) if out_dtype is not None else out


def init_params(key, dim, hidden):
    """Deterministic Xavier-ish init for the 3-layer GAIN generator (f32)."""
    k1, k2, k3 = jax.random.split(key, 3)
    w1 = jax.random.normal(k1, (2 * dim, hidden), jnp.float32) / jnp.sqrt(2.0 * dim)
    w2 = jax.random.normal(k2, (hidden, hidden), jnp.float32) / jnp.sqrt(float(hidden))
    w3 = jax.random.normal(k3, (hidden, dim), jnp.float32) / jnp.sqrt(float(hidden))
    return {
        "w1x": w1[:dim, :],                       # rows multiplying features
        "w1m": w1[dim:, :],                       # rows multiplying the mask
        "b1": jnp.zeros((1, hidden), jnp.float32),
        "w2": w2,
        "b2": jnp.zeros((1, hidden), jnp.float32),
        "w3": w3,
        "b3": jnp.zeros((1, dim), jnp.float32),
    }


def reference_forward(x, m, p):
    """Pure-JAX f32 reference matching the PyTorch semantics (cat + 3 Linear)."""
    inp = jnp.concatenate([x, m], axis=1)
    w1 = jnp.concatenate([p["w1x"], p["w1m"]], axis=0)
    h1 = jax.nn.relu(inp @ w1 + p["b1"])
    h2 = jax.nn.relu(h1 @ p["w2"] + p["b2"])
    return jax.nn.sigmoid(h2 @ p["w3"] + p["b3"])


if __name__ == "__main__":
    B, D, H = 8, 16, 32
    key = jax.random.PRNGKey(0)
    k_x, k_m, k_z, k_p = jax.random.split(key, 4)

    x_data = jax.random.uniform(k_x, (B, D), jnp.float32)          # observed data in [0,1]
    missing_mask = jax.random.bernoulli(k_m, 0.8, (B, D)).astype(jnp.float32)
    noise = jax.random.uniform(k_z, (B, D), jnp.float32) * 0.01
    # GAIN convention: features_combined = mask*data + (1-mask)*noise
    features_combined = missing_mask * x_data + (1.0 - missing_mask) * noise

    params = init_params(k_p, D, H)

    out = gain_generator_forward(features_combined, missing_mask, params)
    out = jax.block_until_ready(out)

    ref = reference_forward(features_combined, missing_mask, params)
    assert out.shape == (B, D)
    # bf16 matmul operands + bf16 output vs. pure-f32 reference: sigmoid
    # outputs live in [0,1], so 2e-2 absolute tolerance is comfortable.
    assert jnp.allclose(out, ref, atol=2e-2, rtol=2e-2), "mismatch vs reference"

    print("KERNEL_OK")
</pallas_src>

<mosaic_0001>
module attributes {stable_mosaic.version = 11 : i64} {
  func.func @_gain_generator_kernel(%arg0: i32, %arg1: memref<16x128xbf16, #tpu.memory_space<vmem>>, %arg2: memref<16x128xbf16, #tpu.memory_space<vmem>>, %arg3: memref<128x128xbf16, #tpu.memory_space<vmem>>, %arg4: memref<128x128xbf16, #tpu.memory_space<vmem>>, %arg5: memref<1x128xf32, #tpu.memory_space<vmem>>, %arg6: memref<128x128xbf16, #tpu.memory_space<vmem>>, %arg7: memref<1x128xf32, #tpu.memory_space<vmem>>, %arg8: memref<128x128xbf16, #tpu.memory_space<vmem>>, %arg9: memref<1x128xf32, #tpu.memory_space<vmem>>, %arg10: memref<16x128xbf16, #tpu.memory_space<vmem>>) attributes {dimension_semantics = [#tpu.dimension_semantics<parallel>], iteration_bounds = array<i64: 1>, scalar_prefetch = 0 : i64, scratch_operands = 0 : i64, tpu.core_type = #tpu.core_type<tc>, window_params = [{transform_indices = @transform_0, window_bounds = array<i64: 16, 128>}, {transform_indices = @transform_1, window_bounds = array<i64: 16, 128>}, {pipeline_mode = #tpu.pipeline_mode<synchronous>, transform_indices = @transform_2, window_bounds = array<i64: 128, 128>}, {pipeline_mode = #tpu.pipeline_mode<synchronous>, transform_indices = @transform_3, window_bounds = array<i64: 128, 128>}, {pipeline_mode = #tpu.pipeline_mode<synchronous>, transform_indices = @transform_4, window_bounds = array<i64: 1, 128>}, {pipeline_mode = #tpu.pipeline_mode<synchronous>, transform_indices = @transform_5, window_bounds = array<i64: 128, 128>}, {pipeline_mode = #tpu.pipeline_mode<synchronous>, transform_indices = @transform_6, window_bounds = array<i64: 1, 128>}, {pipeline_mode = #tpu.pipeline_mode<synchronous>, transform_indices = @transform_7, window_bounds = array<i64: 128, 128>}, {pipeline_mode = #tpu.pipeline_mode<synchronous>, transform_indices = @transform_8, window_bounds = array<i64: 1, 128>}, {transform_indices = @transform_9, window_bounds = array<i64: 16, 128>}]} {
    %c0 = arith.constant 0 : index
    %c0_0 = arith.constant 0 : index
    %0 = vector.load %arg1[%c0, %c0_0] : memref<16x128xbf16, #tpu.memory_space<vmem>>, vector<16x128xbf16>
    %c0_1 = arith.constant 0 : index
    %c0_2 = arith.constant 0 : index
    %1 = vector.load %arg3[%c0_1, %c0_2] : memref<128x128xbf16, #tpu.memory_space<vmem>>, vector<128x128xbf16>
    %cst = arith.constant dense<0.000000e+00> : vector<16x128xf32>
    %2 = tpu.matmul %0, %1, %cst {dimension_numbers = #tpu.dot_dimension_numbers<[1], [0], [0], [1], [0, 0, 1, 1], [], []>} : vector<16x128xbf16>, vector<128x128xbf16>, vector<16x128xf32> -> vector<16x128xf32>
    %c0_3 = arith.constant 0 : index
    %c0_4 = arith.constant 0 : index
    %3 = vector.load %arg2[%c0_3, %c0_4] : memref<16x128xbf16, #tpu.memory_space<vmem>>, vector<16x128xbf16>
    %c0_5 = arith.constant 0 : index
    %c0_6 = arith.constant 0 : index
    %4 = vector.load %arg4[%c0_5, %c0_6] : memref<128x128xbf16, #tpu.memory_space<vmem>>, vector<128x128xbf16>
    %cst_7 = arith.constant dense<0.000000e+00> : vector<16x128xf32>
    %5 = tpu.matmul %3, %4, %cst_7 {dimension_numbers = #tpu.dot_dimension_numbers<[1], [0], [0], [1], [0, 0, 1, 1], [], []>} : vector<16x128xbf16>, vector<128x128xbf16>, vector<16x128xf32> -> vector<16x128xf32>
    %6 = arith.addf %2, %5 : vector<16x128xf32>
    %c0_8 = arith.constant 0 : index
    %c0_9 = arith.constant 0 : index
    %7 = vector.load %arg5[%c0_8, %c0_9] : memref<1x128xf32, #tpu.memory_space<vmem>>, vector<1x128xf32>
    %8 = vector.broadcast %7 : vector<1x128xf32> to vector<16x128xf32>
    %9 = arith.addf %6, %8 : vector<16x128xf32>
    %cst_10 = arith.constant 0.000000e+00 : f32
    %10 = vector.broadcast %cst_10 : f32 to vector<16x128xf32>
    %11 = arith.maximumf %9, %10 : vector<16x128xf32>
    %12 = arith.truncf %11 : vector<16x128xf32> to vector<16x128xbf16>
    %c0_11 = arith.constant 0 : index
    %c0_12 = arith.constant 0 : index
    %13 = vector.load %arg6[%c0_11, %c0_12] : memref<128x128xbf16, #tpu.memory_space<vmem>>, vector<128x128xbf16>
    %cst_13 = arith.constant dense<0.000000e+00> : vector<16x128xf32>
    %14 = tpu.matmul %12, %13, %cst_13 {dimension_numbers = #tpu.dot_dimension_numbers<[1], [0], [0], [1], [0, 0, 1, 1], [], []>} : vector<16x128xbf16>, vector<128x128xbf16>, vector<16x128xf32> -> vector<16x128xf32>
    %c0_14 = arith.constant 0 : index
    %c0_15 = arith.constant 0 : index
    %15 = vector.load %arg7[%c0_14, %c0_15] : memref<1x128xf32, #tpu.memory_space<vmem>>, vector<1x128xf32>
    %16 = vector.broadcast %15 : vector<1x128xf32> to vector<16x128xf32>
    %17 = arith.addf %14, %16 : vector<16x128xf32>
    %cst_16 = arith.constant 0.000000e+00 : f32
    %18 = vector.broadcast %cst_16 : f32 to vector<16x128xf32>
    %19 = arith.maximumf %17, %18 : vector<16x128xf32>
    %20 = arith.truncf %19 : vector<16x128xf32> to vector<16x128xbf16>
    %c0_17 = arith.constant 0 : index
    %c0_18 = arith.constant 0 : index
    %21 = vector.load %arg8[%c0_17, %c0_18] : memref<128x128xbf16, #tpu.memory_space<vmem>>, vector<128x128xbf16>
    %cst_19 = arith.constant dense<0.000000e+00> : vector<16x128xf32>
    %22 = tpu.matmul %20, %21, %cst_19 {dimension_numbers = #tpu.dot_dimension_numbers<[1], [0], [0], [1], [0, 0, 1, 1], [], []>} : vector<16x128xbf16>, vector<128x128xbf16>, vector<16x128xf32> -> vector<16x128xf32>
    %c0_20 = arith.constant 0 : index
    %c0_21 = arith.constant 0 : index
    %23 = vector.load %arg9[%c0_20, %c0_21] : memref<1x128xf32, #tpu.memory_space<vmem>>, vector<1x128xf32>
    %24 = vector.broadcast %23 : vector<1x128xf32> to vector<16x128xf32>
    %25 = arith.addf %22, %24 : vector<16x128xf32>
    %26 = arith.negf %25 : vector<16x128xf32>
    %27 = math.exp %26 : vector<16x128xf32>
    %cst_22 = arith.constant 1.000000e+00 : f32
    %28 = vector.broadcast %cst_22 : f32 to vector<16x128xf32>
    %29 = arith.addf %28, %27 : vector<16x128xf32>
    %30 = arith.divf %28, %29 : vector<16x128xf32>
    %31 = arith.truncf %30 : vector<16x128xf32> to vector<16x128xbf16>
    %c0_23 = arith.constant 0 : index
    %c0_24 = arith.constant 0 : index
    %32 = vector.load %arg10[%c0_23, %c0_24] : memref<16x128xbf16, #tpu.memory_space<vmem>>, vector<16x128xbf16>
    tpu.vector_store %arg10[%c0_23, %c0_24], %31 {strides = array<i32>} : memref<16x128xbf16, #tpu.memory_space<vmem>>, vector<16x128xbf16>,
    return
  }
  func.func @transform_0(%arg0: i32) -> (i32, i32) {
    %c0_i32 = arith.constant 0 : i32
    %c0_i32_0 = arith.constant 0 : i32
    return %arg0, %c0_i32 : i32, i32
  }
  func.func @transform_1(%arg0: i32) -> (i32, i32) {
    %c0_i32 = arith.constant 0 : i32
    %c0_i32_0 = arith.constant 0 : i32
    return %arg0, %c0_i32 : i32, i32
  }
  func.func @transform_2(%arg0: i32) -> (i32, i32) {
    %c0_i32 = arith.constant 0 : i32
    %c0_i32_0 = arith.constant 0 : i32
    %c0_i32_1 = arith.constant 0 : i32
    return %c0_i32, %c0_i32_0 : i32, i32
  }
  func.func @transform_3(%arg0: i32) -> (i32, i32) {
    %c0_i32 = arith.constant 0 : i32
    %c0_i32_0 = arith.constant 0 : i32
    %c0_i32_1 = arith.constant 0 : i32
    return %c0_i32, %c0_i32_0 : i32, i32
  }
  func.func @transform_4(%arg0: i32) -> (i32, i32) {
    %c0_i32 = arith.constant 0 : i32
    %c0_i32_0 = arith.constant 0 : i32
    %c0_i32_1 = arith.constant 0 : i32
    return %c0_i32, %c0_i32_0 : i32, i32
  }
  func.func @transform_5(%arg0: i32) -> (i32, i32) {
    %c0_i32 = arith.constant 0 : i32
    %c0_i32_0 = arith.constant 0 : i32
    %c0_i32_1 = arith.constant 0 : i32
    return %c0_i32, %c0_i32_0 : i32, i32
  }
  func.func @transform_6(%arg0: i32) -> (i32, i32) {
    %c0_i32 = arith.constant 0 : i32
    %c0_i32_0 = arith.constant 0 : i32
    %c0_i32_1 = arith.constant 0 : i32
    return %c0_i32, %c0_i32_0 : i32, i32
  }
  func.func @transform_7(%arg0: i32) -> (i32, i32) {
    %c0_i32 = arith.constant 0 : i32
    %c0_i32_0 = arith.constant 0 : i32
    %c0_i32_1 = arith.constant 0 : i32
    return %c0_i32, %c0_i32_0 : i32, i32
  }
  func.func @transform_8(%arg0: i32) -> (i32, i32) {
    %c0_i32 = arith.constant 0 : i32
    %c0_i32_0 = arith.constant 0 : i32
    %c0_i32_1 = arith.constant 0 : i32
    return %c0_i32, %c0_i32_0 : i32, i32
  }
  func.func @transform_9(%arg0: i32) -> (i32, i32) {
    %c0_i32 = arith.constant 0 : i32
    %c0_i32_0 = arith.constant 0 : i32
    return %arg0, %c0_i32 : i32, i32
  }
}

module attributes {stable_mosaic.version = 11 : i64} {
  func.func @_gain_generator_kernel(%arg0: i32, %arg1: memref<16x128xbf16, #tpu.memory_space<vmem>>, %arg2: memref<16x128xbf16, #tpu.memory_space<vmem>>, %arg3: memref<128x128xbf16, #tpu.memory_space<vmem>>, %arg4: memref<128x128xbf16, #tpu.memory_space<vmem>>, %arg5: memref<1x128xf32, #tpu.memory_space<vmem>>, %arg6: memref<128x128xbf16, #tpu.memory_space<vmem>>, %arg7: memref<1x128xf32, #tpu.memory_space<vmem>>, %arg8: memref<128x128xbf16, #tpu.memory_space<vmem>>, %arg9: memref<1x128xf32, #tpu.memory_space<vmem>>, %arg10: memref<16x128xbf16, #tpu.memory_space<vmem>>) attributes {dimension_semantics = [#tpu.dimension_semantics<parallel>], iteration_bounds = array<i64: 1>, scalar_prefetch = 0 : i64, scratch_operands = 0 : i64, tpu.core_type = #tpu.core_type<tc>, window_params = [{transform_indices = @transform_0, window_bounds = array<i64: 16, 128>}, {transform_indices = @transform_1, window_bounds = array<i64: 16, 128>}, {pipeline_mode = #tpu.pipeline_mode<synchronous>, transform_indices = @transform_2, window_bounds = array<i64: 128, 128>}, {pipeline_mode = #tpu.pipeline_mode<synchronous>, transform_indices = @transform_3, window_bounds = array<i64: 128, 128>}, {pipeline_mode = #tpu.pipeline_mode<synchronous>, transform_indices = @transform_4, window_bounds = array<i64: 1, 128>}, {pipeline_mode = #tpu.pipeline_mode<synchronous>, transform_indices = @transform_5, window_bounds = array<i64: 128, 128>}, {pipeline_mode = #tpu.pipeline_mode<synchronous>, transform_indices = @transform_6, window_bounds = array<i64: 1, 128>}, {pipeline_mode = #tpu.pipeline_mode<synchronous>, transform_indices = @transform_7, window_bounds = array<i64: 128, 128>}, {pipeline_mode = #tpu.pipeline_mode<synchronous>, transform_indices = @transform_8, window_bounds = array<i64: 1, 128>}, {transform_indices = @transform_9, window_bounds = array<i64: 16, 128>}]} {
    %c0 = arith.constant 0 : index
    %c0_0 = arith.constant 0 : index
    %0 = vector.load %arg1[%c0, %c0_0] : memref<16x128xbf16, #tpu.memory_space<vmem>>, vector<16x128xbf16>
    %c0_1 = arith.constant 0 : index
    %c0_2 = arith.constant 0 : index
    %1 = vector.load %arg3[%c0_1, %c0_2] : memref<128x128xbf16, #tpu.memory_space<vmem>>, vector<128x128xbf16>
    %cst = arith.constant dense<0.000000e+00> : vector<16x128xf32>
    %2 = tpu.matmul %0, %1, %cst {dimension_numbers = #tpu.dot_dimension_numbers<[1], [0], [0], [1], [0, 0, 1, 1], [], []>} : vector<16x128xbf16>, vector<128x128xbf16>, vector<16x128xf32> -> vector<16x128xf32>
    %c0_3 = arith.constant 0 : index
    %c0_4 = arith.constant 0 : index
    %3 = vector.load %arg2[%c0_3, %c0_4] : memref<16x128xbf16, #tpu.memory_space<vmem>>, vector<16x128xbf16>
    %c0_5 = arith.constant 0 : index
    %c0_6 = arith.constant 0 : index
    %4 = vector.load %arg4[%c0_5, %c0_6] : memref<128x128xbf16, #tpu.memory_space<vmem>>, vector<128x128xbf16>
    %cst_7 = arith.constant dense<0.000000e+00> : vector<16x128xf32>
    %5 = tpu.matmul %3, %4, %cst_7 {dimension_numbers = #tpu.dot_dimension_numbers<[1], [0], [0], [1], [0, 0, 1, 1], [], []>} : vector<16x128xbf16>, vector<128x128xbf16>, vector<16x128xf32> -> vector<16x128xf32>
    %6 = arith.addf %2, %5 : vector<16x128xf32>
    %c0_8 = arith.constant 0 : index
    %c0_9 = arith.constant 0 : index
    %7 = vector.load %arg5[%c0_8, %c0_9] : memref<1x128xf32, #tpu.memory_space<vmem>>, vector<1x128xf32>
    %8 = vector.broadcast %7 : vector<1x128xf32> to vector<16x128xf32>
    %9 = arith.addf %6, %8 : vector<16x128xf32>
    %cst_10 = arith.constant 0.000000e+00 : f32
    %10 = vector.broadcast %cst_10 : f32 to vector<16x128xf32>
    %11 = arith.maximumf %9, %10 : vector<16x128xf32>
    %12 = arith.truncf %11 : vector<16x128xf32> to vector<16x128xbf16>
    %c0_11 = arith.constant 0 : index
    %c0_12 = arith.constant 0 : index
    %13 = vector.load %arg6[%c0_11, %c0_12] : memref<128x128xbf16, #tpu.memory_space<vmem>>, vector<128x128xbf16>
    %cst_13 = arith.constant dense<0.000000e+00> : vector<16x128xf32>
    %14 = tpu.matmul %12, %13, %cst_13 {dimension_numbers = #tpu.dot_dimension_numbers<[1], [0], [0], [1], [0, 0, 1, 1], [], []>} : vector<16x128xbf16>, vector<128x128xbf16>, vector<16x128xf32> -> vector<16x128xf32>
    %c0_14 = arith.constant 0 : index
    %c0_15 = arith.constant 0 : index
    %15 = vector.load %arg7[%c0_14, %c0_15] : memref<1x128xf32, #tpu.memory_space<vmem>>, vector<1x128xf32>
    %16 = vector.broadcast %15 : vector<1x128xf32> to vector<16x128xf32>
    %17 = arith.addf %14, %16 : vector<16x128xf32>
    %cst_16 = arith.constant 0.000000e+00 : f32
    %18 = vector.broadcast %cst_16 : f32 to vector<16x128xf32>
    %19 = arith.maximumf %17, %18 : vector<16x128xf32>
    %20 = arith.truncf %19 : vector<16x128xf32> to vector<16x128xbf16>
    %c0_17 = arith.constant 0 : index
    %c0_18 = arith.constant 0 : index
    %21 = vector.load %arg8[%c0_17, %c0_18] : memref<128x128xbf16, #tpu.memory_space<vmem>>, vector<128x128xbf16>
    %cst_19 = arith.constant dense<0.000000e+00> : vector<16x128xf32>
    %22 = tpu.matmul %20, %21, %cst_19 {dimension_numbers = #tpu.dot_dimension_numbers<[1], [0], [0], [1], [0, 0, 1, 1], [], []>} : vector<16x128xbf16>, vector<128x128xbf16>, vector<16x128xf32> -> vector<16x128xf32>
    %c0_20 = arith.constant 0 : index
    %c0_21 = arith.constant 0 : index
    %23 = vector.load %arg9[%c0_20, %c0_21] : memref<1x128xf32, #tpu.memory_space<vmem>>, vector<1x128xf32>
    %24 = vector.broadcast %23 : vector<1x128xf32> to vector<16x128xf32>
    %25 = arith.addf %22, %24 : vector<16x128xf32>
    %26 = arith.negf %25 : vector<16x128xf32>
    %27 = math.exp %26 : vector<16x128xf32>
    %cst_22 = arith.constant 1.000000e+00 : f32
    %28 = vector.broadcast %cst_22 : f32 to vector<16x128xf32>
    %29 = arith.addf %28, %27 : vector<16x128xf32>
    %30 = arith.divf %28, %29 : vector<16x128xf32>
    %31 = arith.truncf %30 : vector<16x128xf32> to vector<16x128xbf16>
    %c0_23 = arith.constant 0 : index
    %c0_24 = arith.constant 0 : index
    %32 = vector.load %arg10[%c0_23, %c0_24] : memref<16x128xbf16, #tpu.memory_space<vmem>>, vector<16x128xbf16>
    tpu.vector_store %arg10[%c0_23, %c0_24], %31 {strides = array<i32>} : memref<16x128xbf16, #tpu.memory_space<vmem>>, vector<16x128xbf16>,
    return
  }
  func.func @transform_0(%arg0: i32) -> (i32, i32) {
    %c0_i32 = arith.constant 0 : i32
    %c0_i32_0 = arith.constant 0 : i32
    return %arg0, %c0_i32 : i32, i32
  }
  func.func @transform_1(%arg0: i32) -> (i32, i32) {
    %c0_i32 = arith.constant 0 : i32
    %c0_i32_0 = arith.constant 0 : i32
    return %arg0, %c0_i32 : i32, i32
  }
  func.func @transform_2(%arg0: i32) -> (i32, i32) {
    %c0_i32 = arith.constant 0 : i32
    %c0_i32_0 = arith.constant 0 : i32
    %c0_i32_1 = arith.constant 0 : i32
    return %c0_i32, %c0_i32_0 : i32, i32
  }
  func.func @transform_3(%arg0: i32) -> (i32, i32) {
    %c0_i32 = arith.constant 0 : i32
    %c0_i32_0 = arith.constant 0 : i32
    %c0_i32_1 = arith.constant 0 : i32
    return %c0_i32, %c0_i32_0 : i32, i32
  }
  func.func @transform_4(%arg0: i32) -> (i32, i32) {
    %c0_i32 = arith.constant 0 : i32
    %c0_i32_0 = arith.constant 0 : i32
    %c0_i32_1 = arith.constant 0 : i32
    return %c0_i32, %c0_i32_0 : i32, i32
  }
  func.func @transform_5(%arg0: i32) -> (i32, i32) {
    %c0_i32 = arith.constant 0 : i32
    %c0_i32_0 = arith.constant 0 : i32
    %c0_i32_1 = arith.constant 0 : i32
    return %c0_i32, %c0_i32_0 : i32, i32
  }
  func.func @transform_6(%arg0: i32) -> (i32, i32) {
    %c0_i32 = arith.constant 0 : i32
    %c0_i32_0 = arith.constant 0 : i32
    %c0_i32_1 = arith.constant 0 : i32
    return %c0_i32, %c0_i32_0 : i32, i32
  }
  func.func @transform_7(%arg0: i32) -> (i32, i32) {
    %c0_i32 = arith.constant 0 : i32
    %c0_i32_0 = arith.constant 0 : i32
    %c0_i32_1 = arith.constant 0 : i32
    return %c0_i32, %c0_i32_0 : i32, i32
  }
  func.func @transform_8(%arg0: i32) -> (i32, i32) {
    %c0_i32 = arith.constant 0 : i32
    %c0_i32_0 = arith.constant 0 : i32
    %c0_i32_1 = arith.constant 0 : i32
    return %c0_i32, %c0_i32_0 : i32, i32
  }
  func.func @transform_9(%arg0: i32) -> (i32, i32) {
    %c0_i32 = arith.constant 0 : i32
    %c0_i32_0 = arith.constant 0 : i32
    return %arg0, %c0_i32 : i32, i32
  }
}

</mosaic_0001>

<llo_original>
// kernel: tpu_custom_call.1
$region0: #{tpu_custom_call.1}
  #allocation0 [shape = 'u32[]', space=smem, size = 0x4, offset = 0x4, fixed_abs, tag = 'smem constant byte address 0x4 - core index']
  #allocation1 [shape = 'u32[72,128]{1,0:T(1,128)}', space=vmem, size = 0x9000, scoped, tag = 'internal scratch']
  %s0 = inlined_call_operand.hbm [shape: bf16[16,128], index: 0, kind: input, shape index: {}]
  %s1 = inlined_call_operand.hbm [shape: bf16[16,128], index: 1, kind: input, shape index: {}]
  %s2 = inlined_call_operand.hbm [shape: bf16[128,128], index: 2, kind: input, shape index: {}]
  %s3 = inlined_call_operand.hbm [shape: bf16[128,128], index: 3, kind: input, shape index: {}]
  %s4 = inlined_call_operand.vmem [shape: f32[1,128], index: 4, kind: input, shape index: {}]
  %s5 = inlined_call_operand.hbm [shape: bf16[128,128], index: 5, kind: input, shape index: {}]
  %s6 = inlined_call_operand.vmem [shape: f32[1,128], index: 6, kind: input, shape index: {}]
  %s7 = inlined_call_operand.hbm [shape: bf16[128,128], index: 7, kind: input, shape index: {}]
  %s8 = inlined_call_operand.vmem [shape: f32[1,128], index: 8, kind: input, shape index: {}]
  %s9 = inlined_call_operand.hbm [shape: bf16[16,128], index: 9, kind: output, shape index: {}]
  %s10 = sld [smem:[#allocation0]]
  $region70: #{tpu_custom_call.1} parent=0
    _
  %s12 = ssub.s32 1, %s10
  %s13 = scalar_select 0, %s12, %s10
  $region1: #{tpu_custom_call.1} parent=0
    #allocation2 [shape = 'u8[4096]{0}', space=vmem, size = 0x1000, scoped, tag = 'input window, operand 0, single buffered']
    #allocation3 [shape = 's32[1]{0}', space=sflag, size = 0x4, scoped, tag = 'scoped memory for tpu_custom_call.1']
    #allocation4 [shape = 's32[1]{0}', space=sflag, size = 0x4, scoped, tag = 'scoped memory for tpu_custom_call.1']
    #allocation5 [shape = 'u8[4096]{0}', space=vmem, size = 0x1000, scoped, tag = 'input window, operand 1, single buffered']
    #allocation6 [shape = 's32[1]{0}', space=sflag, size = 0x4, scoped, tag = 'scoped memory for tpu_custom_call.1']
    #allocation7 [shape = 'u8[32768]{0}', space=vmem, size = 0x8000, scoped, tag = 'input window, operand 2, single buffered']
    #allocation8 [shape = 'u8[32768]{0}', space=vmem, size = 0x8000, scoped, tag = 'input window, operand 3, single buffered']
    #allocation9 [shape = 's32[1]{0}', space=sflag, size = 0x4, scoped, tag = 'scoped memory for tpu_custom_call.1']
    #allocation10 [shape = 'u8[32768]{0}', space=vmem, size = 0x8000, scoped, tag = 'input window, operand 5, single buffered']
    #allocation11 [shape = 'u8[32768]{0}', space=vmem, size = 0x8000, scoped, tag = 'input window, operand 7, single buffered']
    #allocation12 [shape = 's32[1]{0}', space=sflag, size = 0x4, scoped, tag = 'scoped memory for tpu_custom_call.1']
    #allocation13 [shape = 'u8[4096]{0}', space=vmem, size = 0x1000, scoped, tag = 'output window, operand 0, single buffered']
    %14 = vsyncpa [#allocation3], 0
    %15 = vsyncpa [#allocation6], 0
    %16 = vsyncpa [#allocation9], 0
    %17 = vsyncpa [#allocation12], 0
    %18 = vsyncpa [#allocation4], 0
    // Predicated region
    $region2: #{tpu_custom_call.1} parent=1 // pred_check
      _
    $region3: #{tpu_custom_call.1} parent=1 // pred_check_branch
      %20 = sbr.rel (0) target = $region5
    $region4: #{tpu_custom_call.1} parent=1 // pred_region
      %22 = vsyncadd [#allocation3], 0
      %s23 = sshll.u32 %s0, 4
      %s24 = int_to_ptr.hbm [resolvable:$true] %s23
      %s25 = sshll.u32 [#allocation2], 4
      %s26 = int_to_ptr.vmem [resolvable:$true] %s25
      %31 = dma.hbm_to_vmem [thread:$0]  %s24, 128, %s26, [#allocation3], 64, 64, 4
    $region5: #{tpu_custom_call.1} parent=1 // pred_fallthru
      _
    // Predicated region
    $region6: #{tpu_custom_call.1} parent=1 // pred_check
      _
    $region7: #{tpu_custom_call.1} parent=1 // pred_check_branch
      %33 = sbr.rel (0) target = $region9
    $region8: #{tpu_custom_call.1} parent=1 // pred_region
      %35 = vsyncadd [#allocation6], 0
      %s36 = sshll.u32 %s1, 4
      %s37 = int_to_ptr.hbm [resolvable:$true] %s36
      %s38 = sshll.u32 [#allocation5], 4
      %s39 = int_to_ptr.vmem [resolvable:$true] %s38
      %44 = dma.hbm_to_vmem [thread:$0]  %s37, 128, %s39, [#allocation6], 64, 64, 4
    $region9: #{tpu_custom_call.1} parent=1 // pred_fallthru
      _
    // Predicated region
    $region10: #{tpu_custom_call.1} parent=1 // pred_check
      _
    $region11: #{tpu_custom_call.1} parent=1 // pred_check_branch
      %46 = sbr.rel (0) target = $region13
    $region12: #{tpu_custom_call.1} parent=1 // pred_region
      %48 = vsyncadd [#allocation6], 0
      %s49 = sshll.u32 %s2, 4
      %s50 = int_to_ptr.hbm [resolvable:$true] %s49
      %s51 = sshll.u32 [#allocation7], 4
      %s52 = int_to_ptr.vmem [resolvable:$true] %s51
      %57 = dma.hbm_to_vmem [thread:$0]  %s50, 1024, %s52, [#allocation6], 64, 64, 4
    $region13: #{tpu_custom_call.1} parent=1 // pred_fallthru
      _
    // Predicated region
    $region14: #{tpu_custom_call.1} parent=1 // pred_check
      _
    $region15: #{tpu_custom_call.1} parent=1 // pred_check_branch
      %59 = sbr.rel (0) target = $region17
    $region16: #{tpu_custom_call.1} parent=1 // pred_region
      %61 = vsyncadd [#allocation9], 0
      %s62 = sshll.u32 %s3, 4
      %s63 = int_to_ptr.hbm [resolvable:$true] %s62
      %s64 = sshll.u32 [#allocation8], 4
      %s65 = int_to_ptr.vmem [resolvable:$true] %s64
      %70 = dma.hbm_to_vmem [thread:$0]  %s63, 1024, %s65, [#allocation9], 64, 64, 4
    $region17: #{tpu_custom_call.1} parent=1 // pred_fallthru
      _
    // Predicated region
    $region18: #{tpu_custom_call.1} parent=1 // pred_check
      _
    $region19: #{tpu_custom_call.1} parent=1 // pred_check_branch
      %72 = sbr.rel (0) target = $region21
    $region20: #{tpu_custom_call.1} parent=1 // pred_region
      _
    $region21: #{tpu_custom_call.1} parent=1 // pred_fallthru
      _
    // Predicated region
    $region22: #{tpu_custom_call.1} parent=1 // pred_check
      _
    $region23: #{tpu_custom_call.1} parent=1 // pred_check_branch
      %74 = sbr.rel (0) target = $region25
    $region24: #{tpu_custom_call.1} parent=1 // pred_region
      %76 = vsyncadd [#allocation9], 0
      %s77 = sshll.u32 %s5, 4
      %s78 = int_to_ptr.hbm [resolvable:$true] %s77
      %s79 = sshll.u32 [#allocation10], 4
      %s80 = int_to_ptr.vmem [resolvable:$true] %s79
      %85 = dma.hbm_to_vmem [thread:$0]  %s78, 1024, %s80, [#allocation9], 64, 64, 4
    $region25: #{tpu_custom_call.1} parent=1 // pred_fallthru
      _
    // Predicated region
    $region26: #{tpu_custom_call.1} parent=1 // pred_check
      _
    $region27: #{tpu_custom_call.1} parent=1 // pred_check_branch
      %87 = sbr.rel (0) target = $region29
    $region28: #{tpu_custom_call.1} parent=1 // pred_region
      _
    $region29: #{tpu_custom_call.1} parent=1 // pred_fallthru
      _
    // Predicated region
    $region30: #{tpu_custom_call.1} parent=1 // pred_check
      _
    $region31: #{tpu_custom_call.1} parent=1 // pred_check_branch
      %89 = sbr.rel (0) target = $region33
    $region32: #{tpu_custom_call.1} parent=1 // pred_region
      %91 = vsyncadd [#allocation12], 0
      %s92 = sshll.u32 %s7, 4
      %s93 = int_to_ptr.hbm [resolvable:$true] %s92
      %s94 = sshll.u32 [#allocation11], 4
      %s95 = int_to_ptr.vmem [resolvable:$true] %s94
      %100 = dma.hbm_to_vmem [thread:$0]  %s93, 1024, %s95, [#allocation12], 64, 64, 4
    $region33: #{tpu_custom_call.1} parent=1 // pred_fallthru
      _
    // Predicated region
    $region34: #{tpu_custom_call.1} parent=1 // pred_check
      _
    $region35: #{tpu_custom_call.1} parent=1 // pred_check_branch
      %102 = sbr.rel (0) target = $region37
    $region36: #{tpu_custom_call.1} parent=1 // pred_region
      _
    $region37: #{tpu_custom_call.1} parent=1 // pred_fallthru
      _
    // Predicated region
    $region38: #{tpu_custom_call.1} parent=1 // pred_check
      _
    $region39: #{tpu_custom_call.1} parent=1 // pred_check_branch
      %104 = sbr.rel (0) target = $region41
    $region40: #{tpu_custom_call.1} parent=1 // pred_region
      %106 = dma.done [#allocation3], 128
    $region41: #{tpu_custom_call.1} parent=1 // pred_fallthru
      _
    // Predicated region
    $region42: #{tpu_custom_call.1} parent=1 // pred_check
      _
    $region43: #{tpu_custom_call.1} parent=1 // pred_check_branch
      %108 = sbr.rel (0) target = $region45
    $region44: #{tpu_custom_call.1} parent=1 // pred_region
      %110 = dma.done [#allocation6], 128
    $region45: #{tpu_custom_call.1} parent=1 // pred_fallthru
      _
    // Predicated region
    $region46: #{tpu_custom_call.1} parent=1 // pred_check
      _
    $region47: #{tpu_custom_call.1} parent=1 // pred_check_branch
      %112 = sbr.rel (0) target = $region49
    $region48: #{tpu_custom_call.1} parent=1 // pred_region
      %114 = dma.done [#allocation6], 1024
    $region49: #{tpu_custom_call.1} parent=1 // pred_fallthru
      _
    // Predicated region
    $region50: #{tpu_custom_call.1} parent=1 // pred_check
      _
    $region51: #{tpu_custom_call.1} parent=1 // pred_check_branch
      %116 = sbr.rel (0) target = $region53
    $region52: #{tpu_custom_call.1} parent=1 // pred_region
      %118 = dma.done [#allocation9], 1024
    $region53: #{tpu_custom_call.1} parent=1 // pred_fallthru
      _
    // Predicated region
    $region54: #{tpu_custom_call.1} parent=1 // pred_check
      _
    $region55: #{tpu_custom_call.1} parent=1 // pred_check_branch
      %120 = sbr.rel (0) target = $region57
    $region56: #{tpu_custom_call.1} parent=1 // pred_region
      %122 = dma.done [#allocation9], 1024
    $region57: #{tpu_custom_call.1} parent=1 // pred_fallthru
      _
    // Predicated region
    $region58: #{tpu_custom_call.1} parent=1 // pred_check
      _
    $region59: #{tpu_custom_call.1} parent=1 // pred_check_branch
      %124 = sbr.rel (0) target = $region61
    $region60: #{tpu_custom_call.1} parent=1 // pred_region
      %126 = dma.done [#allocation12], 1024
    $region61: #{tpu_custom_call.1} parent=1 // pred_fallthru
      _
    %v127 = vld [vmem:[#allocation2] sm:$0xf]
    %v128 = vld [vmem:[#allocation2 + $0x4] sm:$0xf]
    %v129 = vld [vmem:[#allocation7] sm:$0xf]
    %v130 = vld [vmem:[#allocation7 + $0x4] sm:$0xf]
    %v131 = vld [vmem:[#allocation7 + $0x8] sm:$0xf]
    %v132 = vld [vmem:[#allocation7 + $0xc] sm:$0xf]
    %v133 = vld [vmem:[#allocation7 + $0x10] sm:$0xf]
    %v134 = vld [vmem:[#allocation7 + $0x14] sm:$0xf]
    %v135 = vld [vmem:[#allocation7 + $0x18] sm:$0xf]
    %v136 = vld [vmem:[#allocation7 + $0x1c] sm:$0xf]
    %v137 = vld [vmem:[#allocation7 + $0x20] sm:$0xf]
    %v138 = vld [vmem:[#allocation7 + $0x24] sm:$0xf]
    %v139 = vld [vmem:[#allocation7 + $0x28] sm:$0xf]
    %v140 = vld [vmem:[#allocation7 + $0x2c] sm:$0xf]
    %v141 = vld [vmem:[#allocation7 + $0x30] sm:$0xf]
    %v142 = vld [vmem:[#allocation7 + $0x34] sm:$0xf]
    %v143 = vld [vmem:[#allocation7 + $0x38] sm:$0xf]
    %v144 = vld [vmem:[#allocation7 + $0x3c] sm:$0xf]
    %v145 = vld [vmem:[#allocation5] sm:$0xf]
    %v146 = vld [vmem:[#allocation5 + $0x4] sm:$0xf]
    %v147 = vld [vmem:[#allocation8] sm:$0xf]
    %v148 = vld [vmem:[#allocation8 + $0x4] sm:$0xf]
    %v149 = vld [vmem:[#allocation8 + $0x8] sm:$0xf]
    %v150 = vld [vmem:[#allocation8 + $0xc] sm:$0xf]
    %v151 = vld [vmem:[#allocation8 + $0x10] sm:$0xf]
    %v152 = vld [vmem:[#allocation8 + $0x14] sm:$0xf]
    %v153 = vld [vmem:[#allocation8 + $0x18] sm:$0xf]
    %v154 = vld [vmem:[#allocation8 + $0x1c] sm:$0xf]
    %v155 = vld [vmem:[#allocation8 + $0x20] sm:$0xf]
    %v156 = vld [vmem:[#allocation8 + $0x24] sm:$0xf]
    %v157 = vld [vmem:[#allocation8 + $0x28] sm:$0xf]
    %v158 = vld [vmem:[#allocation8 + $0x2c] sm:$0xf]
    %v159 = vld [vmem:[#allocation8 + $0x30] sm:$0xf]
    %v160 = vld [vmem:[#allocation8 + $0x34] sm:$0xf]
    %v161 = vld [vmem:[#allocation8 + $0x38] sm:$0xf]
    %v162 = vld [vmem:[#allocation8 + $0x3c] sm:$0xf]
    %v165 = vunpack.c.l.b16 %v145
    %v166 = vunpack.c.l.b16 %v146
    %v167 = vpack.c.b16 %v166, %v165
    %v185 = vunpack.c.l.b16 %v147
    %v186 = vunpack.c.l.b16 %v148
    %v187 = vunpack.c.l.b16 %v149
    %v188 = vunpack.c.l.b16 %v150
    %v189 = vunpack.c.l.b16 %v151
    %v190 = vunpack.c.l.b16 %v152
    %v191 = vunpack.c.l.b16 %v153
    %v192 = vunpack.c.l.b16 %v154
    %v193 = vunpack.c.l.b16 %v155
    %v194 = vunpack.c.l.b16 %v156
    %v195 = vunpack.c.l.b16 %v157
    %v196 = vunpack.c.l.b16 %v158
    %v197 = vunpack.c.l.b16 %v159
    %v198 = vunpack.c.l.b16 %v160
    %v199 = vunpack.c.l.b16 %v161
    %v200 = vunpack.c.l.b16 %v162
    %v201 = vpack.c.b16 %v186, %v185
    %v202 = vpack.c.b16 %v188, %v187
    %v203 = vpack.c.b16 %v190, %v189
    %v204 = vpack.c.b16 %v192, %v191
    %v205 = vpack.c.b16 %v194, %v193
    %v206 = vpack.c.b16 %v196, %v195
    %v207 = vpack.c.b16 %v198, %v197
    %v208 = vpack.c.b16 %v200, %v199
    %217 = vmatpush.bf16.msra.mxu0 %v208
    %218 = vmatpush.bf16.msra.mxu0 %v207
    %219 = vmatpush.bf16.msra.mxu0 %v206
    %220 = vmatpush.bf16.msra.mxu0 %v205
    %221 = vmatpush.bf16.msra.mxu0 %v204
    %222 = vmatpush.bf16.msra.mxu0 %v203
    %223 = vmatpush.bf16.msra.mxu0 %v202
    %224 = vmatpush.bf16.msra.mxu0 %v201
    %225 = vmatmul.bf16.gmra.mxu0 %v167
    %v226 = vpop.f32.mrf.mxu0
    %v227 = vadd.f32 0.0, %v226
    %v228 = vpop.f32.mrf.mxu0
    %v229 = vadd.f32 0.0, %v228
    %230 = vdwg.mxu0
    %v233 = vunpack.c.l.b16 %v127
    %v234 = vunpack.c.l.b16 %v128
    %v235 = vpack.c.b16 %v234, %v233
    %v253 = vunpack.c.l.b16 %v129
    %v254 = vunpack.c.l.b16 %v130
    %v255 = vunpack.c.l.b16 %v131
    %v256 = vunpack.c.l.b16 %v132
    %v257 = vunpack.c.l.b16 %v133
    %v258 = vunpack.c.l.b16 %v134
    %v259 = vunpack.c.l.b16 %v135
    %v260 = vunpack.c.l.b16 %v136
    %v261 = vunpack.c.l.b16 %v137
    %v262 = vunpack.c.l.b16 %v138
    %v263 = vunpack.c.l.b16 %v139
    %v264 = vunpack.c.l.b16 %v140
    %v265 = vunpack.c.l.b16 %v141
    %v266 = vunpack.c.l.b16 %v142
    %v267 = vunpack.c.l.b16 %v143
    %v268 = vunpack.c.l.b16 %v144
    %v269 = vpack.c.b16 %v254, %v253
    %v270 = vpack.c.b16 %v256, %v255
    %v271 = vpack.c.b16 %v258, %v257
    %v272 = vpack.c.b16 %v260, %v259
    %v273 = vpack.c.b16 %v262, %v261
    %v274 = vpack.c.b16 %v264, %v263
    %v275 = vpack.c.b16 %v266, %v265
    %v276 = vpack.c.b16 %v268, %v267
    %285 = vmatpush.bf16.msra.mxu0 %v276
    %286 = vmatpush.bf16.msra.mxu0 %v275
    %287 = vmatpush.bf16.msra.mxu0 %v274
    %288 = vmatpush.bf16.msra.mxu0 %v273
    %289 = vmatpush.bf16.msra.mxu0 %v272
    %290 = vmatpush.bf16.msra.mxu0 %v271
    %291 = vmatpush.bf16.msra.mxu0 %v270
    %292 = vmatpush.bf16.msra.mxu0 %v269
    %293 = vmatmul.bf16.gmra.mxu0 %v235
    %v294 = vpop.f32.mrf.mxu0
    %v295 = vadd.f32 %v227, %v294
    %v296 = vpop.f32.mrf.mxu0
    %v297 = vadd.f32 %v229, %v296
    %298 = vdwg.mxu0
    %v299 = vld [vmem:[%s4] sm:$0x1]
    %v301 = vperm.slane %v299, 0
    %v303 = vadd.f32 %v295, %v301
    %v304 = vadd.f32 %v297, %v301
    %v305 = vmax.f32 %v303, 0.0
    %v306 = vmax.f32 %v304, 0.0
    %v307 = vpack.c.bf16 %v306, %v305
    %v308 = vld [vmem:[#allocation10] sm:$0xf]
    %v309 = vld [vmem:[#allocation10 + $0x4] sm:$0xf]
    %v310 = vld [vmem:[#allocation10 + $0x8] sm:$0xf]
    %v311 = vld [vmem:[#allocation10 + $0xc] sm:$0xf]
    %v312 = vld [vmem:[#allocation10 + $0x10] sm:$0xf]
    %v313 = vld [vmem:[#allocation10 + $0x14] sm:$0xf]
    %v314 = vld [vmem:[#allocation10 + $0x18] sm:$0xf]
    %v315 = vld [vmem:[#allocation10 + $0x1c] sm:$0xf]
    %v316 = vld [vmem:[#allocation10 + $0x20] sm:$0xf]
    %v317 = vld [vmem:[#allocation10 + $0x24] sm:$0xf]
    %v318 = vld [vmem:[#allocation10 + $0x28] sm:$0xf]
    %v319 = vld [vmem:[#allocation10 + $0x2c] sm:$0xf]
    %v320 = vld [vmem:[#allocation10 + $0x30] sm:$0xf]
    %v321 = vld [vmem:[#allocation10 + $0x34] sm:$0xf]
    %v322 = vld [vmem:[#allocation10 + $0x38] sm:$0xf]
    %v323 = vld [vmem:[#allocation10 + $0x3c] sm:$0xf]
    %v324 = vld [vmem:[%s6] sm:$0x1]
    %v326 = vperm.slane %v324, 0
    %v344 = vunpack.c.l.b16 %v308
    %v345 = vunpack.c.l.b16 %v309
    %v346 = vunpack.c.l.b16 %v310
    %v347 = vunpack.c.l.b16 %v311
    %v348 = vunpack.c.l.b16 %v312
    %v349 = vunpack.c.l.b16 %v313
    %v350 = vunpack.c.l.b16 %v314
    %v351 = vunpack.c.l.b16 %v315
    %v352 = vunpack.c.l.b16 %v316
    %v353 = vunpack.c.l.b16 %v317
    %v354 = vunpack.c.l.b16 %v318
    %v355 = vunpack.c.l.b16 %v319
    %v356 = vunpack.c.l.b16 %v320
    %v357 = vunpack.c.l.b16 %v321
    %v358 = vunpack.c.l.b16 %v322
    %v359 = vunpack.c.l.b16 %v323
    %v360 = vpack.c.b16 %v345, %v344
    %v361 = vpack.c.b16 %v347, %v346
    %v362 = vpack.c.b16 %v349, %v348
    %v363 = vpack.c.b16 %v351, %v350
    %v364 = vpack.c.b16 %v353, %v352
    %v365 = vpack.c.b16 %v355, %v354
    %v366 = vpack.c.b16 %v357, %v356
    %v367 = vpack.c.b16 %v359, %v358
    %376 = vmatpush.bf16.msra.mxu0 %v367
    %377 = vmatpush.bf16.msra.mxu0 %v366
    %378 = vmatpush.bf16.msra.mxu0 %v365
    %379 = vmatpush.bf16.msra.mxu0 %v364
    %380 = vmatpush.bf16.msra.mxu0 %v363
    %381 = vmatpush.bf16.msra.mxu0 %v362
    %382 = vmatpush.bf16.msra.mxu0 %v361
    %383 = vmatpush.bf16.msra.mxu0 %v360
    %384 = vmatmul.bf16.gmra.mxu0 %v307
    %v385 = vpop.f32.mrf.mxu0
    %v386 = vadd.f32 %v326, %v385
    %v387 = vpop.f32.mrf.mxu0
    %v388 = vadd.f32 %v326, %v387
    %389 = vdwg.mxu0
    %v390 = vmax.f32 %v386, 0.0
    %v391 = vmax.f32 %v388, 0.0
    %v392 = vpack.c.bf16 %v391, %v390
    %v393 = vld [vmem:[#allocation11] sm:$0xf]
    %v394 = vld [vmem:[#allocation11 + $0x4] sm:$0xf]
    %v395 = vld [vmem:[#allocation11 + $0x8] sm:$0xf]
    %v396 = vld [vmem:[#allocation11 + $0xc] sm:$0xf]
    %v397 = vld [vmem:[#allocation11 + $0x10] sm:$0xf]
    %v398 = vld [vmem:[#allocation11 + $0x14] sm:$0xf]
    %v399 = vld [vmem:[#allocation11 + $0x18] sm:$0xf]
    %v400 = vld [vmem:[#allocation11 + $0x1c] sm:$0xf]
    %v401 = vld [vmem:[#allocation11 + $0x20] sm:$0xf]
    %v402 = vld [vmem:[#allocation11 + $0x24] sm:$0xf]
    %v403 = vld [vmem:[#allocation11 + $0x28] sm:$0xf]
    %v404 = vld [vmem:[#allocation11 + $0x2c] sm:$0xf]
    %v405 = vld [vmem:[#allocation11 + $0x30] sm:$0xf]
    %v406 = vld [vmem:[#allocation11 + $0x34] sm:$0xf]
    %v407 = vld [vmem:[#allocation11 + $0x38] sm:$0xf]
    %v408 = vld [vmem:[#allocation11 + $0x3c] sm:$0xf]
    %v409 = vld [vmem:[%s8] sm:$0x1]
    %v411 = vperm.slane %v409, 0
    %v429 = vunpack.c.l.b16 %v393
    %v430 = vunpack.c.l.b16 %v394
    %v431 = vunpack.c.l.b16 %v395
    %v432 = vunpack.c.l.b16 %v396
    %v433 = vunpack.c.l.b16 %v397
    %v434 = vunpack.c.l.b16 %v398
    %v435 = vunpack.c.l.b16 %v399
    %v436 = vunpack.c.l.b16 %v400
    %v437 = vunpack.c.l.b16 %v401
    %v438 = vunpack.c.l.b16 %v402
    %v439 = vunpack.c.l.b16 %v403
    %v440 = vunpack.c.l.b16 %v404
    %v441 = vunpack.c.l.b16 %v405
    %v442 = vunpack.c.l.b16 %v406
    %v443 = vunpack.c.l.b16 %v407
    %v444 = vunpack.c.l.b16 %v408
    %v445 = vpack.c.b16 %v430, %v429
    %v446 = vpack.c.b16 %v432, %v431
    %v447 = vpack.c.b16 %v434, %v433
    %v448 = vpack.c.b16 %v436, %v435
    %v449 = vpack.c.b16 %v438, %v437
    %v450 = vpack.c.b16 %v440, %v439
    %v451 = vpack.c.b16 %v442, %v441
    %v452 = vpack.c.b16 %v444, %v443
    %461 = vmatpush.bf16.msra.mxu0 %v452
    %462 = vmatpush.bf16.msra.mxu0 %v451
    %463 = vmatpush.bf16.msra.mxu0 %v450
    %464 = vmatpush.bf16.msra.mxu0 %v449
    %465 = vmatpush.bf16.msra.mxu0 %v448
    %466 = vmatpush.bf16.msra.mxu0 %v447
    %467 = vmatpush.bf16.msra.mxu0 %v446
    %468 = vmatpush.bf16.msra.mxu0 %v445
    %469 = vmatmul.bf16.gmra.mxu0 %v392
    %v470 = vpop.f32.mrf.mxu0
    %v471 = vadd.f32 %v411, %v470
    %v472 = vpop.f32.mrf.mxu0
    %v473 = vadd.f32 %v411, %v472
    %474 = vdwg.mxu0
    %v475 = vxor.u32 %v471, 2147483648
    %v476 = vxor.u32 %v473, 2147483648
    %v477 = vmul.f32 %v475, 1.442695
    %v478 = vpow.pop %v477
    %v479 = vmul.f32 %v476, 1.442695
    %v480 = vpow.pop %v479
    %v481 = vadd.f32 %v478, 1.0
    %v482 = vadd.f32 %v480, 1.0
    %v483 = vrcp.pop %v481
    %v484 = vmul.f32 %v481, %v483
    %v485 = vsub.f32 1.0, %v484
    %v486 = vmul.f32 %v483, %v485
    %v487 = vadd.f32 %v483, %v486
    %vm488 = vweird.f32 %v481
    %vm489 = vweird.f32 %v483
    %vm490 = vmor %vm488, %vm489
    %v491 = vsel %vm490, %v483, %v487
    %v492 = vand.u32 2147483647, %v481
    %vm493 = vcmp.eq.f32.partialorder %v492, 8.507059e+37
    %v494 = vand.u32 %v481, 2147483648
    %v495 = vor.u32 1.1754944e-38, %v494
    %v496 = vsel %vm493, %v495, %v491
    %v497 = vmul.f32 1.0, %v496
    %v498 = vrcp.pop %v482
    %v499 = vmul.f32 %v482, %v498
    %v500 = vsub.f32 1.0, %v499
    %v501 = vmul.f32 %v498, %v500
    %v502 = vadd.f32 %v498, %v501
    %vm503 = vweird.f32 %v482
    %vm504 = vweird.f32 %v498
    %vm505 = vmor %vm503, %vm504
    %v506 = vsel %vm505, %v498, %v502
    %v507 = vand.u32 2147483647, %v482
    %vm508 = vcmp.eq.f32.partialorder %v507, 8.507059e+37
    %v509 = vand.u32 %v482, 2147483648
    %v510 = vor.u32 1.1754944e-38, %v509
    %v511 = vsel %vm508, %v510, %v506
    %v512 = vmul.f32 1.0, %v511
    %v513 = vpack.c.bf16 %v497, %v497
    %v514 = vpack.c.bf16 %v512, %v512
    %515 = vst [vmem:[#allocation13] sm:$0xf] %v513
    %516 = vst [vmem:[#allocation13 + $0x4] sm:$0xf] %v514
    // Predicated region
    $region62: #{tpu_custom_call.1} parent=1 // pred_check
      _
    $region63: #{tpu_custom_call.1} parent=1 // pred_check_branch
      %518 = sbr.rel (0) target = $region65
    $region64: #{tpu_custom_call.1} parent=1 // pred_region
      %520 = vsyncadd [#allocation4], 0
      %s521 = sshll.u32 [#allocation13], 4
      %s522 = int_to_ptr.vmem [resolvable:$true] %s521
      %s523 = sshll.u32 %s9, 4
      %s524 = int_to_ptr.hbm [resolvable:$true] %s523
      %529 = dma.vmem_to_hbm [thread:$0]  %s522, 128, %s524, [#allocation4], 64, 64, 4
    $region65: #{tpu_custom_call.1} parent=1 // pred_fallthru
      _
    // Predicated region
    $region66: #{tpu_custom_call.1} parent=1 // pred_check
      _
    $region67: #{tpu_custom_call.1} parent=1 // pred_check_branch
      %531 = sbr.rel (0) target = $region69
    $region68: #{tpu_custom_call.1} parent=1 // pred_region
      %533 = dma.done [#allocation4], 128
    $region69: #{tpu_custom_call.1} parent=1 // pred_fallthru
      _
    %534 = vsyncpa [#allocation3], 1
    %535 = vsyncpa [#allocation6], 1
    %536 = vsyncpa [#allocation9], 1
    %537 = vsyncpa [#allocation12], 1
    %538 = vsyncpa [#allocation4], 1

// kernel: tpu_custom_call.1
$region0: #{tpu_custom_call.1}
  #allocation0 [shape = 'u32[]', space=smem, size = 0x4, offset = 0x4, fixed_abs, tag = 'smem constant byte address 0x4 - core index']
  #allocation1 [shape = 'u32[72,128]{1,0:T(1,128)}', space=vmem, size = 0x9000, scoped, tag = 'internal scratch']
  %s0 = inlined_call_operand.hbm [shape: bf16[16,128], index: 0, kind: input, shape index: {}]
  %s1 = inlined_call_operand.hbm [shape: bf16[16,128], index: 1, kind: input, shape index: {}]
  %s2 = inlined_call_operand.hbm [shape: bf16[128,128], index: 2, kind: input, shape index: {}]
  %s3 = inlined_call_operand.hbm [shape: bf16[128,128], index: 3, kind: input, shape index: {}]
  %s4 = inlined_call_operand.vmem [shape: f32[1,128], index: 4, kind: input, shape index: {}]
  %s5 = inlined_call_operand.hbm [shape: bf16[128,128], index: 5, kind: input, shape index: {}]
  %s6 = inlined_call_operand.vmem [shape: f32[1,128], index: 6, kind: input, shape index: {}]
  %s7 = inlined_call_operand.hbm [shape: bf16[128,128], index: 7, kind: input, shape index: {}]
  %s8 = inlined_call_operand.vmem [shape: f32[1,128], index: 8, kind: input, shape index: {}]
  %s9 = inlined_call_operand.hbm [shape: bf16[16,128], index: 9, kind: output, shape index: {}]
  %s10 = sld [smem:[#allocation0]]
  $region70: #{tpu_custom_call.1} parent=0
    _
  %s12 = ssub.s32 1, %s10
  %s13 = scalar_select 0, %s12, %s10
  $region1: #{tpu_custom_call.1} parent=0
    #allocation2 [shape = 'u8[4096]{0}', space=vmem, size = 0x1000, scoped, tag = 'input window, operand 0, single buffered']
    #allocation3 [shape = 's32[1]{0}', space=sflag, size = 0x4, scoped, tag = 'scoped memory for tpu_custom_call.1']
    #allocation4 [shape = 's32[1]{0}', space=sflag, size = 0x4, scoped, tag = 'scoped memory for tpu_custom_call.1']
    #allocation5 [shape = 'u8[4096]{0}', space=vmem, size = 0x1000, scoped, tag = 'input window, operand 1, single buffered']
    #allocation6 [shape = 's32[1]{0}', space=sflag, size = 0x4, scoped, tag = 'scoped memory for tpu_custom_call.1']
    #allocation7 [shape = 'u8[32768]{0}', space=vmem, size = 0x8000, scoped, tag = 'input window, operand 2, single buffered']
    #allocation8 [shape = 'u8[32768]{0}', space=vmem, size = 0x8000, scoped, tag = 'input window, operand 3, single buffered']
    #allocation9 [shape = 's32[1]{0}', space=sflag, size = 0x4, scoped, tag = 'scoped memory for tpu_custom_call.1']
    #allocation10 [shape = 'u8[32768]{0}', space=vmem, size = 0x8000, scoped, tag = 'input window, operand 5, single buffered']
    #allocation11 [shape = 'u8[32768]{0}', space=vmem, size = 0x8000, scoped, tag = 'input window, operand 7, single buffered']
    #allocation12 [shape = 's32[1]{0}', space=sflag, size = 0x4, scoped, tag = 'scoped memory for tpu_custom_call.1']
    #allocation13 [shape = 'u8[4096]{0}', space=vmem, size = 0x1000, scoped, tag = 'output window, operand 0, single buffered']
    %14 = vsyncpa [#allocation3], 0
    %15 = vsyncpa [#allocation6], 0
    %16 = vsyncpa [#allocation9], 0
    %17 = vsyncpa [#allocation12], 0
    %18 = vsyncpa [#allocation4], 0
    // Predicated region
    $region2: #{tpu_custom_call.1} parent=1 // pred_check
      _
    $region3: #{tpu_custom_call.1} parent=1 // pred_check_branch
      %20 = sbr.rel (0) target = $region5
    $region4: #{tpu_custom_call.1} parent=1 // pred_region
      %22 = vsyncadd [#allocation3], 0
      %s23 = sshll.u32 %s0, 4
      %s24 = int_to_ptr.hbm [resolvable:$true] %s23
      %s25 = sshll.u32 [#allocation2], 4
      %s26 = int_to_ptr.vmem [resolvable:$true] %s25
      %31 = dma.hbm_to_vmem [thread:$0]  %s24, 128, %s26, [#allocation3], 64, 64, 4
    $region5: #{tpu_custom_call.1} parent=1 // pred_fallthru
      _
    // Predicated region
    $region6: #{tpu_custom_call.1} parent=1 // pred_check
      _
    $region7: #{tpu_custom_call.1} parent=1 // pred_check_branch
      %33 = sbr.rel (0) target = $region9
    $region8: #{tpu_custom_call.1} parent=1 // pred_region
      %35 = vsyncadd [#allocation6], 0
      %s36 = sshll.u32 %s1, 4
      %s37 = int_to_ptr.hbm [resolvable:$true] %s36
      %s38 = sshll.u32 [#allocation5], 4
      %s39 = int_to_ptr.vmem [resolvable:$true] %s38
      %44 = dma.hbm_to_vmem [thread:$0]  %s37, 128, %s39, [#allocation6], 64, 64, 4
    $region9: #{tpu_custom_call.1} parent=1 // pred_fallthru
      _
    // Predicated region
    $region10: #{tpu_custom_call.1} parent=1 // pred_check
      _
    $region11: #{tpu_custom_call.1} parent=1 // pred_check_branch
      %46 = sbr.rel (0) target = $region13
    $region12: #{tpu_custom_call.1} parent=1 // pred_region
      %48 = vsyncadd [#allocation6], 0
      %s49 = sshll.u32 %s2, 4
      %s50 = int_to_ptr.hbm [resolvable:$true] %s49
      %s51 = sshll.u32 [#allocation7], 4
      %s52 = int_to_ptr.vmem [resolvable:$true] %s51
      %57 = dma.hbm_to_vmem [thread:$0]  %s50, 1024, %s52, [#allocation6], 64, 64, 4
    $region13: #{tpu_custom_call.1} parent=1 // pred_fallthru
      _
    // Predicated region
    $region14: #{tpu_custom_call.1} parent=1 // pred_check
      _
    $region15: #{tpu_custom_call.1} parent=1 // pred_check_branch
      %59 = sbr.rel (0) target = $region17
    $region16: #{tpu_custom_call.1} parent=1 // pred_region
      %61 = vsyncadd [#allocation9], 0
      %s62 = sshll.u32 %s3, 4
      %s63 = int_to_ptr.hbm [resolvable:$true] %s62
      %s64 = sshll.u32 [#allocation8], 4
      %s65 = int_to_ptr.vmem [resolvable:$true] %s64
      %70 = dma.hbm_to_vmem [thread:$0]  %s63, 1024, %s65, [#allocation9], 64, 64, 4
    $region17: #{tpu_custom_call.1} parent=1 // pred_fallthru
      _
    // Predicated region
    $region18: #{tpu_custom_call.1} parent=1 // pred_check
      _
    $region19: #{tpu_custom_call.1} parent=1 // pred_check_branch
      %72 = sbr.rel (0) target = $region21
    $region20: #{tpu_custom_call.1} parent=1 // pred_region
      _
    $region21: #{tpu_custom_call.1} parent=1 // pred_fallthru
      _
    // Predicated region
    $region22: #{tpu_custom_call.1} parent=1 // pred_check
      _
    $region23: #{tpu_custom_call.1} parent=1 // pred_check_branch
      %74 = sbr.rel (0) target = $region25
    $region24: #{tpu_custom_call.1} parent=1 // pred_region
      %76 = vsyncadd [#allocation9], 0
      %s77 = sshll.u32 %s5, 4
      %s78 = int_to_ptr.hbm [resolvable:$true] %s77
      %s79 = sshll.u32 [#allocation10], 4
      %s80 = int_to_ptr.vmem [resolvable:$true] %s79
      %85 = dma.hbm_to_vmem [thread:$0]  %s78, 1024, %s80, [#allocation9], 64, 64, 4
    $region25: #{tpu_custom_call.1} parent=1 // pred_fallthru
      _
    // Predicated region
    $region26: #{tpu_custom_call.1} parent=1 // pred_check
      _
    $region27: #{tpu_custom_call.1} parent=1 // pred_check_branch
      %87 = sbr.rel (0) target = $region29
    $region28: #{tpu_custom_call.1} parent=1 // pred_region
      _
    $region29: #{tpu_custom_call.1} parent=1 // pred_fallthru
      _
    // Predicated region
    $region30: #{tpu_custom_call.1} parent=1 // pred_check
      _
    $region31: #{tpu_custom_call.1} parent=1 // pred_check_branch
      %89 = sbr.rel (0) target = $region33
    $region32: #{tpu_custom_call.1} parent=1 // pred_region
      %91 = vsyncadd [#allocation12], 0
      %s92 = sshll.u32 %s7, 4
      %s93 = int_to_ptr.hbm [resolvable:$true] %s92
      %s94 = sshll.u32 [#allocation11], 4
      %s95 = int_to_ptr.vmem [resolvable:$true] %s94
      %100 = dma.hbm_to_vmem [thread:$0]  %s93, 1024, %s95, [#allocation12], 64, 64, 4
    $region33: #{tpu_custom_call.1} parent=1 // pred_fallthru
      _
    // Predicated region
    $region34: #{tpu_custom_call.1} parent=1 // pred_check
      _
    $region35: #{tpu_custom_call.1} parent=1 // pred_check_branch
      %102 = sbr.rel (0) target = $region37
    $region36: #{tpu_custom_call.1} parent=1 // pred_region
      _
    $region37: #{tpu_custom_call.1} parent=1 // pred_fallthru
      _
    // Predicated region
    $region38: #{tpu_custom_call.1} parent=1 // pred_check
      _
    $region39: #{tpu_custom_call.1} parent=1 // pred_check_branch
      %104 = sbr.rel (0) target = $region41
    $region40: #{tpu_custom_call.1} parent=1 // pred_region
      %106 = dma.done [#allocation3], 128
    $region41: #{tpu_custom_call.1} parent=1 // pred_fallthru
      _
    // Predicated region
    $region42: #{tpu_custom_call.1} parent=1 // pred_check
      _
    $region43: #{tpu_custom_call.1} parent=1 // pred_check_branch
      %108 = sbr.rel (0) target = $region45
    $region44: #{tpu_custom_call.1} parent=1 // pred_region
      %110 = dma.done [#allocation6], 128
    $region45: #{tpu_custom_call.1} parent=1 // pred_fallthru
      _
    // Predicated region
    $region46: #{tpu_custom_call.1} parent=1 // pred_check
      _
    $region47: #{tpu_custom_call.1} parent=1 // pred_check_branch
      %112 = sbr.rel (0) target = $region49
    $region48: #{tpu_custom_call.1} parent=1 // pred_region
      %114 = dma.done [#allocation6], 1024
    $region49: #{tpu_custom_call.1} parent=1 // pred_fallthru
      _
    // Predicated region
    $region50: #{tpu_custom_call.1} parent=1 // pred_check
      _
    $region51: #{tpu_custom_call.1} parent=1 // pred_check_branch
      %116 = sbr.rel (0) target = $region53
    $region52: #{tpu_custom_call.1} parent=1 // pred_region
      %118 = dma.done [#allocation9], 1024
    $region53: #{tpu_custom_call.1} parent=1 // pred_fallthru
      _
    // Predicated region
    $region54: #{tpu_custom_call.1} parent=1 // pred_check
      _
    $region55: #{tpu_custom_call.1} parent=1 // pred_check_branch
      %120 = sbr.rel (0) target = $region57
    $region56: #{tpu_custom_call.1} parent=1 // pred_region
      %122 = dma.done [#allocation9], 1024
    $region57: #{tpu_custom_call.1} parent=1 // pred_fallthru
      _
    // Predicated region
    $region58: #{tpu_custom_call.1} parent=1 // pred_check
      _
    $region59: #{tpu_custom_call.1} parent=1 // pred_check_branch
      %124 = sbr.rel (0) target = $region61
    $region60: #{tpu_custom_call.1} parent=1 // pred_region
      %126 = dma.done [#allocation12], 1024
    $region61: #{tpu_custom_call.1} parent=1 // pred_fallthru
      _
    %v127 = vld [vmem:[#allocation2] sm:$0xf]
    %v128 = vld [vmem:[#allocation2 + $0x4] sm:$0xf]
    %v129 = vld [vmem:[#allocation7] sm:$0xf]
    %v130 = vld [vmem:[#allocation7 + $0x4] sm:$0xf]
    %v131 = vld [vmem:[#allocation7 + $0x8] sm:$0xf]
    %v132 = vld [vmem:[#allocation7 + $0xc] sm:$0xf]
    %v133 = vld [vmem:[#allocation7 + $0x10] sm:$0xf]
    %v134 = vld [vmem:[#allocation7 + $0x14] sm:$0xf]
    %v135 = vld [vmem:[#allocation7 + $0x18] sm:$0xf]
    %v136 = vld [vmem:[#allocation7 + $0x1c] sm:$0xf]
    %v137 = vld [vmem:[#allocation7 + $0x20] sm:$0xf]
    %v138 = vld [vmem:[#allocation7 + $0x24] sm:$0xf]
    %v139 = vld [vmem:[#allocation7 + $0x28] sm:$0xf]
    %v140 = vld [vmem:[#allocation7 + $0x2c] sm:$0xf]
    %v141 = vld [vmem:[#allocation7 + $0x30] sm:$0xf]
    %v142 = vld [vmem:[#allocation7 + $0x34] sm:$0xf]
    %v143 = vld [vmem:[#allocation7 + $0x38] sm:$0xf]
    %v144 = vld [vmem:[#allocation7 + $0x3c] sm:$0xf]
    %v145 = vld [vmem:[#allocation5] sm:$0xf]
    %v146 = vld [vmem:[#allocation5 + $0x4] sm:$0xf]
    %v147 = vld [vmem:[#allocation8] sm:$0xf]
    %v148 = vld [vmem:[#allocation8 + $0x4] sm:$0xf]
    %v149 = vld [vmem:[#allocation8 + $0x8] sm:$0xf]
    %v150 = vld [vmem:[#allocation8 + $0xc] sm:$0xf]
    %v151 = vld [vmem:[#allocation8 + $0x10] sm:$0xf]
    %v152 = vld [vmem:[#allocation8 + $0x14] sm:$0xf]
    %v153 = vld [vmem:[#allocation8 + $0x18] sm:$0xf]
    %v154 = vld [vmem:[#allocation8 + $0x1c] sm:$0xf]
    %v155 = vld [vmem:[#allocation8 + $0x20] sm:$0xf]
    %v156 = vld [vmem:[#allocation8 + $0x24] sm:$0xf]
    %v157 = vld [vmem:[#allocation8 + $0x28] sm:$0xf]
    %v158 = vld [vmem:[#allocation8 + $0x2c] sm:$0xf]
    %v159 = vld [vmem:[#allocation8 + $0x30] sm:$0xf]
    %v160 = vld [vmem:[#allocation8 + $0x34] sm:$0xf]
    %v161 = vld [vmem:[#allocation8 + $0x38] sm:$0xf]
    %v162 = vld [vmem:[#allocation8 + $0x3c] sm:$0xf]
    %v165 = vunpack.c.l.b16 %v145
    %v166 = vunpack.c.l.b16 %v146
    %v167 = vpack.c.b16 %v166, %v165
    %v185 = vunpack.c.l.b16 %v147
    %v186 = vunpack.c.l.b16 %v148
    %v187 = vunpack.c.l.b16 %v149
    %v188 = vunpack.c.l.b16 %v150
    %v189 = vunpack.c.l.b16 %v151
    %v190 = vunpack.c.l.b16 %v152
    %v191 = vunpack.c.l.b16 %v153
    %v192 = vunpack.c.l.b16 %v154
    %v193 = vunpack.c.l.b16 %v155
    %v194 = vunpack.c.l.b16 %v156
    %v195 = vunpack.c.l.b16 %v157
    %v196 = vunpack.c.l.b16 %v158
    %v197 = vunpack.c.l.b16 %v159
    %v198 = vunpack.c.l.b16 %v160
    %v199 = vunpack.c.l.b16 %v161
    %v200 = vunpack.c.l.b16 %v162
    %v201 = vpack.c.b16 %v186, %v185
    %v202 = vpack.c.b16 %v188, %v187
    %v203 = vpack.c.b16 %v190, %v189
    %v204 = vpack.c.b16 %v192, %v191
    %v205 = vpack.c.b16 %v194, %v193
    %v206 = vpack.c.b16 %v196, %v195
    %v207 = vpack.c.b16 %v198, %v197
    %v208 = vpack.c.b16 %v200, %v199
    %217 = vmatpush.bf16.msra.mxu0 %v208
    %218 = vmatpush.bf16.msra.mxu0 %v207
    %219 = vmatpush.bf16.msra.mxu0 %v206
    %220 = vmatpush.bf16.msra.mxu0 %v205
    %221 = vmatpush.bf16.msra.mxu0 %v204
    %222 = vmatpush.bf16.msra.mxu0 %v203
    %223 = vmatpush.bf16.msra.mxu0 %v202
    %224 = vmatpush.bf16.msra.mxu0 %v201
    %225 = vmatmul.bf16.gmra.mxu0 %v167
    %v226 = vpop.f32.mrf.mxu0
    %v227 = vadd.f32 0.0, %v226
    %v228 = vpop.f32.mrf.mxu0
    %v229 = vadd.f32 0.0, %v228
    %230 = vdwg.mxu0
    %v233 = vunpack.c.l.b16 %v127
    %v234 = vunpack.c.l.b16 %v128
    %v235 = vpack.c.b16 %v234, %v233
    %v253 = vunpack.c.l.b16 %v129
    %v254 = vunpack.c.l.b16 %v130
    %v255 = vunpack.c.l.b16 %v131
    %v256 = vunpack.c.l.b16 %v132
    %v257 = vunpack.c.l.b16 %v133
    %v258 = vunpack.c.l.b16 %v134
    %v259 = vunpack.c.l.b16 %v135
    %v260 = vunpack.c.l.b16 %v136
    %v261 = vunpack.c.l.b16 %v137
    %v262 = vunpack.c.l.b16 %v138
    %v263 = vunpack.c.l.b16 %v139
    %v264 = vunpack.c.l.b16 %v140
    %v265 = vunpack.c.l.b16 %v141
    %v266 = vunpack.c.l.b16 %v142
    %v267 = vunpack.c.l.b16 %v143
    %v268 = vunpack.c.l.b16 %v144
    %v269 = vpack.c.b16 %v254, %v253
    %v270 = vpack.c.b16 %v256, %v255
    %v271 = vpack.c.b16 %v258, %v257
    %v272 = vpack.c.b16 %v260, %v259
    %v273 = vpack.c.b16 %v262, %v261
    %v274 = vpack.c.b16 %v264, %v263
    %v275 = vpack.c.b16 %v266, %v265
    %v276 = vpack.c.b16 %v268, %v267
    %285 = vmatpush.bf16.msra.mxu0 %v276
    %286 = vmatpush.bf16.msra.mxu0 %v275
    %287 = vmatpush.bf16.msra.mxu0 %v274
    %288 = vmatpush.bf16.msra.mxu0 %v273
    %289 = vmatpush.bf16.msra.mxu0 %v272
    %290 = vmatpush.bf16.msra.mxu0 %v271
    %291 = vmatpush.bf16.msra.mxu0 %v270
    %292 = vmatpush.bf16.msra.mxu0 %v269
    %293 = vmatmul.bf16.gmra.mxu0 %v235
    %v294 = vpop.f32.mrf.mxu0
    %v295 = vadd.f32 %v227, %v294
    %v296 = vpop.f32.mrf.mxu0
    %v297 = vadd.f32 %v229, %v296
    %298 = vdwg.mxu0
    %v299 = vld [vmem:[%s4] sm:$0x1]
    %v301 = vperm.slane %v299, 0
    %v303 = vadd.f32 %v295, %v301
    %v304 = vadd.f32 %v297, %v301
    %v305 = vmax.f32 %v303, 0.0
    %v306 = vmax.f32 %v304, 0.0
    %v307 = vpack.c.bf16 %v306, %v305
    %v308 = vld [vmem:[#allocation10] sm:$0xf]
    %v309 = vld [vmem:[#allocation10 + $0x4] sm:$0xf]
    %v310 = vld [vmem:[#allocation10 + $0x8] sm:$0xf]
    %v311 = vld [vmem:[#allocation10 + $0xc] sm:$0xf]
    %v312 = vld [vmem:[#allocation10 + $0x10] sm:$0xf]
    %v313 = vld [vmem:[#allocation10 + $0x14] sm:$0xf]
    %v314 = vld [vmem:[#allocation10 + $0x18] sm:$0xf]
    %v315 = vld [vmem:[#allocation10 + $0x1c] sm:$0xf]
    %v316 = vld [vmem:[#allocation10 + $0x20] sm:$0xf]
    %v317 = vld [vmem:[#allocation10 + $0x24] sm:$0xf]
    %v318 = vld [vmem:[#allocation10 + $0x28] sm:$0xf]
    %v319 = vld [vmem:[#allocation10 + $0x2c] sm:$0xf]
    %v320 = vld [vmem:[#allocation10 + $0x30] sm:$0xf]
    %v321 = vld [vmem:[#allocation10 + $0x34] sm:$0xf]
    %v322 = vld [vmem:[#allocation10 + $0x38] sm:$0xf]
    %v323 = vld [vmem:[#allocation10 + $0x3c] sm:$0xf]
    %v324 = vld [vmem:[%s6] sm:$0x1]
    %v326 = vperm.slane %v324, 0
    %v344 = vunpack.c.l.b16 %v308
    %v345 = vunpack.c.l.b16 %v309
    %v346 = vunpack.c.l.b16 %v310
    %v347 = vunpack.c.l.b16 %v311
    %v348 = vunpack.c.l.b16 %v312
    %v349 = vunpack.c.l.b16 %v313
    %v350 = vunpack.c.l.b16 %v314
    %v351 = vunpack.c.l.b16 %v315
    %v352 = vunpack.c.l.b16 %v316
    %v353 = vunpack.c.l.b16 %v317
    %v354 = vunpack.c.l.b16 %v318
    %v355 = vunpack.c.l.b16 %v319
    %v356 = vunpack.c.l.b16 %v320
    %v357 = vunpack.c.l.b16 %v321
    %v358 = vunpack.c.l.b16 %v322
    %v359 = vunpack.c.l.b16 %v323
    %v360 = vpack.c.b16 %v345, %v344
    %v361 = vpack.c.b16 %v347, %v346
    %v362 = vpack.c.b16 %v349, %v348
    %v363 = vpack.c.b16 %v351, %v350
    %v364 = vpack.c.b16 %v353, %v352
    %v365 = vpack.c.b16 %v355, %v354
    %v366 = vpack.c.b16 %v357, %v356
    %v367 = vpack.c.b16 %v359, %v358
    %376 = vmatpush.bf16.msra.mxu0 %v367
    %377 = vmatpush.bf16.msra.mxu0 %v366
    %378 = vmatpush.bf16.msra.mxu0 %v365
    %379 = vmatpush.bf16.msra.mxu0 %v364
    %380 = vmatpush.bf16.msra.mxu0 %v363
    %381 = vmatpush.bf16.msra.mxu0 %v362
    %382 = vmatpush.bf16.msra.mxu0 %v361
    %383 = vmatpush.bf16.msra.mxu0 %v360
    %384 = vmatmul.bf16.gmra.mxu0 %v307
    %v385 = vpop.f32.mrf.mxu0
    %v386 = vadd.f32 %v326, %v385
    %v387 = vpop.f32.mrf.mxu0
    %v388 = vadd.f32 %v326, %v387
    %389 = vdwg.mxu0
    %v390 = vmax.f32 %v386, 0.0
    %v391 = vmax.f32 %v388, 0.0
    %v392 = vpack.c.bf16 %v391, %v390
    %v393 = vld [vmem:[#allocation11] sm:$0xf]
    %v394 = vld [vmem:[#allocation11 + $0x4] sm:$0xf]
    %v395 = vld [vmem:[#allocation11 + $0x8] sm:$0xf]
    %v396 = vld [vmem:[#allocation11 + $0xc] sm:$0xf]
    %v397 = vld [vmem:[#allocation11 + $0x10] sm:$0xf]
    %v398 = vld [vmem:[#allocation11 + $0x14] sm:$0xf]
    %v399 = vld [vmem:[#allocation11 + $0x18] sm:$0xf]
    %v400 = vld [vmem:[#allocation11 + $0x1c] sm:$0xf]
    %v401 = vld [vmem:[#allocation11 + $0x20] sm:$0xf]
    %v402 = vld [vmem:[#allocation11 + $0x24] sm:$0xf]
    %v403 = vld [vmem:[#allocation11 + $0x28] sm:$0xf]
    %v404 = vld [vmem:[#allocation11 + $0x2c] sm:$0xf]
    %v405 = vld [vmem:[#allocation11 + $0x30] sm:$0xf]
    %v406 = vld [vmem:[#allocation11 + $0x34] sm:$0xf]
    %v407 = vld [vmem:[#allocation11 + $0x38] sm:$0xf]
    %v408 = vld [vmem:[#allocation11 + $0x3c] sm:$0xf]
    %v409 = vld [vmem:[%s8] sm:$0x1]
    %v411 = vperm.slane %v409, 0
    %v429 = vunpack.c.l.b16 %v393
    %v430 = vunpack.c.l.b16 %v394
    %v431 = vunpack.c.l.b16 %v395
    %v432 = vunpack.c.l.b16 %v396
    %v433 = vunpack.c.l.b16 %v397
    %v434 = vunpack.c.l.b16 %v398
    %v435 = vunpack.c.l.b16 %v399
    %v436 = vunpack.c.l.b16 %v400
    %v437 = vunpack.c.l.b16 %v401
    %v438 = vunpack.c.l.b16 %v402
    %v439 = vunpack.c.l.b16 %v403
    %v440 = vunpack.c.l.b16 %v404
    %v441 = vunpack.c.l.b16 %v405
    %v442 = vunpack.c.l.b16 %v406
    %v443 = vunpack.c.l.b16 %v407
    %v444 = vunpack.c.l.b16 %v408
    %v445 = vpack.c.b16 %v430, %v429
    %v446 = vpack.c.b16 %v432, %v431
    %v447 = vpack.c.b16 %v434, %v433
    %v448 = vpack.c.b16 %v436, %v435
    %v449 = vpack.c.b16 %v438, %v437
    %v450 = vpack.c.b16 %v440, %v439
    %v451 = vpack.c.b16 %v442, %v441
    %v452 = vpack.c.b16 %v444, %v443
    %461 = vmatpush.bf16.msra.mxu0 %v452
    %462 = vmatpush.bf16.msra.mxu0 %v451
    %463 = vmatpush.bf16.msra.mxu0 %v450
    %464 = vmatpush.bf16.msra.mxu0 %v449
    %465 = vmatpush.bf16.msra.mxu0 %v448
    %466 = vmatpush.bf16.msra.mxu0 %v447
    %467 = vmatpush.bf16.msra.mxu0 %v446
    %468 = vmatpush.bf16.msra.mxu0 %v445
    %469 = vmatmul.bf16.gmra.mxu0 %v392
    %v470 = vpop.f32.mrf.mxu0
    %v471 = vadd.f32 %v411, %v470
    %v472 = vpop.f32.mrf.mxu0
    %v473 = vadd.f32 %v411, %v472
    %474 = vdwg.mxu0
    %v475 = vxor.u32 %v471, 2147483648
    %v476 = vxor.u32 %v473, 2147483648
    %v477 = vmul.f32 %v475, 1.442695
    %v478 = vpow.pop %v477
    %v479 = vmul.f32 %v476, 1.442695
    %v480 = vpow.pop %v479
    %v481 = vadd.f32 %v478, 1.0
    %v482 = vadd.f32 %v480, 1.0
    %v483 = vrcp.pop %v481
    %v484 = vmul.f32 %v481, %v483
    %v485 = vsub.f32 1.0, %v484
    %v486 = vmul.f32 %v483, %v485
    %v487 = vadd.f32 %v483, %v486
    %vm488 = vweird.f32 %v481
    %vm489 = vweird.f32 %v483
    %vm490 = vmor %vm488, %vm489
    %v491 = vsel %vm490, %v483, %v487
    %v492 = vand.u32 2147483647, %v481
    %vm493 = vcmp.eq.f32.partialorder %v492, 8.507059e+37
    %v494 = vand.u32 %v481, 2147483648
    %v495 = vor.u32 1.1754944e-38, %v494
    %v496 = vsel %vm493, %v495, %v491
    %v497 = vmul.f32 1.0, %v496
    %v498 = vrcp.pop %v482
    %v499 = vmul.f32 %v482, %v498
    %v500 = vsub.f32 1.0, %v499
    %v501 = vmul.f32 %v498, %v500
    %v502 = vadd.f32 %v498, %v501
    %vm503 = vweird.f32 %v482
    %vm504 = vweird.f32 %v498
    %vm505 = vmor %vm503, %vm504
    %v506 = vsel %vm505, %v498, %v502
    %v507 = vand.u32 2147483647, %v482
    %vm508 = vcmp.eq.f32.partialorder %v507, 8.507059e+37
    %v509 = vand.u32 %v482, 2147483648
    %v510 = vor.u32 1.1754944e-38, %v509
    %v511 = vsel %vm508, %v510, %v506
    %v512 = vmul.f32 1.0, %v511
    %v513 = vpack.c.bf16 %v497, %v497
    %v514 = vpack.c.bf16 %v512, %v512
    %515 = vst [vmem:[#allocation13] sm:$0xf] %v513
    %516 = vst [vmem:[#allocation13 + $0x4] sm:$0xf] %v514
    // Predicated region
    $region62: #{tpu_custom_call.1} parent=1 // pred_check
      _
    $region63: #{tpu_custom_call.1} parent=1 // pred_check_branch
      %518 = sbr.rel (0) target = $region65
    $region64: #{tpu_custom_call.1} parent=1 // pred_region
      %520 = vsyncadd [#allocation4], 0
      %s521 = sshll.u32 [#allocation13], 4
      %s522 = int_to_ptr.vmem [resolvable:$true] %s521
      %s523 = sshll.u32 %s9, 4
      %s524 = int_to_ptr.hbm [resolvable:$true] %s523
      %529 = dma.vmem_to_hbm [thread:$0]  %s522, 128, %s524, [#allocation4], 64, 64, 4
    $region65: #{tpu_custom_call.1} parent=1 // pred_fallthru
      _
    // Predicated region
    $region66: #{tpu_custom_call.1} parent=1 // pred_check
      _
    $region67: #{tpu_custom_call.1} parent=1 // pred_check_branch
      %531 = sbr.rel (0) target = $region69
    $region68: #{tpu_custom_call.1} parent=1 // pred_region
      %533 = dma.done [#allocation4], 128
    $region69: #{tpu_custom_call.1} parent=1 // pred_fallthru
      _
    %534 = vsyncpa [#allocation3], 1
    %535 = vsyncpa [#allocation6], 1
    %536 = vsyncpa [#allocation9], 1
    %537 = vsyncpa [#allocation12], 1
    %538 = vsyncpa [#allocation4], 1

</llo_original>
